<compile_context>
chip_gen: v7x
topology: tpu7x:2x2x1
jax: 0.10.0
libtpu: 0.0.40
codegen_flags: <defaults>
</compile_context>

<pallas_src>
import jax
import jax.numpy as jnp
from jax.experimental import pallas as pl
from jax.experimental.pallas import tpu as pltpu

BN_EPS = 1e-5


def _resblock_kernel(x_ref, mask_ref,
                     w1_ref, b1_ref, g1_ref, be1_ref,
                     w2_ref, b2_ref, g2_ref, be2_ref,
                     out_ref, xs_ref):
    N, L, C = x_ref.shape
    S = xs_ref.shape[0]
    Lg = S // N

    # ---- stage input into the zero-guarded, batch-stacked (S, C) scratch ----
    xs_ref[...] = jnp.zeros_like(xs_ref)          # guard rows stay zero
    for b in range(N):                            # aligned sublane stores (Lg % 8 == 0)
        xs_ref[pl.ds(b * Lg, L), :] = x_ref[b]

    x0 = xs_ref[...]                              # (S, C): residual, guards are zero
    mask = mask_ref[...]                          # (S, 1): 1 on real rows, 0 on guards
    denom = 1.0 / float(N * L)

    def conv(x, w_ref, b_ref):
        # Pack the 3 taps into the contraction dim -> one (S, 3C)@(3C, C) matmul.
        # pltpu.roll wrap-around hits zero guard rows, giving "same" padding.
        taps = jnp.concatenate(
            [pltpu.roll(x, shift=1, axis=0),        # x[l-1]
             x,                                     # x[l]
             pltpu.roll(x, shift=S - 1, axis=0)],   # x[l+1]
            axis=1)
        return jnp.dot(taps, w_ref[...],
                       preferred_element_type=jnp.float32) + b_ref[...]

    def batchnorm(h, g_ref, be_ref):
        # Training-mode BatchNorm1d: biased batch stats over (N, L) real rows only.
        hm = h * mask
        mean = jnp.sum(hm, axis=0, keepdims=True) * denom
        centered = (hm - mean) * mask             # two-pass variance (robust)
        var = jnp.sum(centered * centered, axis=0, keepdims=True) * denom
        scale = jax.lax.rsqrt(var + BN_EPS) * g_ref[...]
        return centered * scale + be_ref[...]     # fused multiply-add affine

    h = batchnorm(conv(x0, w1_ref, b1_ref), g1_ref, be1_ref)
    a = jnp.maximum(h, 0.0) * mask                # re-zero guards before next conv
    h = batchnorm(conv(a, w2_ref, b2_ref), g2_ref, be2_ref)
    out_ref[...] = jnp.maximum(h + x0, 0.0)       # residual add + ReLU, one store


def residual_block_forward(x_ncw, params):
    """x_ncw: (N, C, L) float32, PyTorch NCW layout. Returns (N, C, L)."""
    N, C, L = x_ncw.shape
    G = (-L) % 8 or 8                             # >=1 zero guard rows, Lg % 8 == 0
    Lg = L + G
    S = N * Lg

    x_nlc = jnp.transpose(x_ncw, (0, 2, 1))       # (N, L, C), channels-last
    row = jnp.arange(S, dtype=jnp.int32)
    mask = ((row % Lg) < L).astype(jnp.float32).reshape(S, 1)

    def pack_w(w):                                # (C_out, C_in, K) -> (K*C_in, C_out)
        K = w.shape[2]
        return jnp.transpose(w, (2, 1, 0)).reshape(K * w.shape[1], w.shape[0])

    args = (x_nlc, mask,
            pack_w(params["w1"]), params["b1"].reshape(1, C),
            params["g1"].reshape(1, C), params["be1"].reshape(1, C),
            pack_w(params["w2"]), params["b2"].reshape(1, C),
            params["g2"].reshape(1, C), params["be2"].reshape(1, C))

    vmem = lambda: pl.BlockSpec(memory_space=pltpu.MemorySpace.VMEM)
    y = pl.pallas_call(
        _resblock_kernel,
        out_shape=jax.ShapeDtypeStruct((S, C), jnp.float32),
        in_specs=[vmem() for _ in args],
        out_specs=vmem(),
        scratch_shapes=[pltpu.VMEM((S, C), jnp.float32)],
    )(*args)

    # un-stack: (S, C) -> (N, Lg, C) -> drop guards -> back to NCW
    return jnp.transpose(y.reshape(N, Lg, C)[:, :L, :], (0, 2, 1))


def init_params(key, channels):
    """Deterministic synthetic parameters for ResidualBlock(channels)."""
    ks = jax.random.split(key, 4)
    return {
        "w1": 0.1 * jax.random.normal(ks[0], (channels, channels, 3), jnp.float32),
        "b1": 0.05 * jax.random.normal(ks[1], (channels,), jnp.float32),
        "w2": 0.1 * jax.random.normal(ks[2], (channels, channels, 3), jnp.float32),
        "b2": 0.05 * jax.random.normal(ks[3], (channels,), jnp.float32),
        # PyTorch BatchNorm1d default init: weight = 1, bias = 0
        "g1": jnp.ones((channels,), jnp.float32),
        "be1": jnp.zeros((channels,), jnp.float32),
        "g2": jnp.ones((channels,), jnp.float32),
        "be2": jnp.zeros((channels,), jnp.float32),
    }


if __name__ == "__main__":
    key = jax.random.PRNGKey(0)
    kx, kp = jax.random.split(key)
    N, C, L = 2, 16, 16                           # small shapes: ResidualBlock(16)
    x = jax.random.normal(kx, (N, C, L), jnp.float32)   # PyTorch NCW layout
    params = init_params(kp, C)
    out = residual_block_forward(x, params)
    jax.block_until_ready(out)
    assert out.shape == (N, C, L) and out.dtype == jnp.float32
    print("KERNEL_OK")
</pallas_src>

<mosaic_0001>
module attributes {stable_mosaic.version = 11 : i64} {
  func.func @_resblock_kernel(%arg0: memref<2x16x16xf32, #tpu.memory_space<vmem>>, %arg1: memref<48x1xf32, #tpu.memory_space<vmem>>, %arg2: memref<48x16xf32, #tpu.memory_space<vmem>>, %arg3: memref<1x16xf32, #tpu.memory_space<vmem>>, %arg4: memref<1x16xf32, #tpu.memory_space<vmem>>, %arg5: memref<1x16xf32, #tpu.memory_space<vmem>>, %arg6: memref<48x16xf32, #tpu.memory_space<vmem>>, %arg7: memref<1x16xf32, #tpu.memory_space<vmem>>, %arg8: memref<1x16xf32, #tpu.memory_space<vmem>>, %arg9: memref<1x16xf32, #tpu.memory_space<vmem>>, %arg10: memref<48x16xf32, #tpu.memory_space<vmem>>, %arg11: memref<48x16xf32, #tpu.memory_space<vmem>>) attributes {dimension_semantics = [], scalar_prefetch = 0 : i64, scratch_operands = 1 : i64, tpu.core_type = #tpu.core_type<tc>} {
    %cst = arith.constant 0.000000e+00 : f32
    %0 = vector.broadcast %cst : f32 to vector<48x16xf32>
    %c0 = arith.constant 0 : index
    %c0_0 = arith.constant 0 : index
    %1 = vector.load %arg11[%c0, %c0_0] : memref<48x16xf32, #tpu.memory_space<vmem>>, vector<48x16xf32>
    tpu.vector_store %arg11[%c0, %c0_0], %0 {strides = array<i32>} : memref<48x16xf32, #tpu.memory_space<vmem>>, vector<48x16xf32>,
    %c0_1 = arith.constant 0 : index
    %c0_2 = arith.constant 0 : index
    %c0_3 = arith.constant 0 : index
    %2 = vector.load %arg0[%c0_1, %c0_2, %c0_3] : memref<2x16x16xf32, #tpu.memory_space<vmem>>, vector<1x16x16xf32>
    %3 = vector.shape_cast %2 : vector<1x16x16xf32> to vector<16x16xf32>
    %c0_4 = arith.constant 0 : index
    %c0_5 = arith.constant 0 : index
    %4 = vector.load %arg11[%c0_4, %c0_5] : memref<48x16xf32, #tpu.memory_space<vmem>>, vector<16x16xf32>
    tpu.vector_store %arg11[%c0_4, %c0_5], %3 {strides = array<i32>} : memref<48x16xf32, #tpu.memory_space<vmem>>, vector<16x16xf32>,
    %c1 = arith.constant 1 : index
    %c0_6 = arith.constant 0 : index
    %c0_7 = arith.constant 0 : index
    %5 = vector.load %arg0[%c1, %c0_6, %c0_7] : memref<2x16x16xf32, #tpu.memory_space<vmem>>, vector<1x16x16xf32>
    %6 = vector.shape_cast %5 : vector<1x16x16xf32> to vector<16x16xf32>
    %c24 = arith.constant 24 : index
    %c0_8 = arith.constant 0 : index
    %7 = vector.load %arg11[%c24, %c0_8] : memref<48x16xf32, #tpu.memory_space<vmem>>, vector<16x16xf32>
    tpu.vector_store %arg11[%c24, %c0_8], %6 {strides = array<i32>} : memref<48x16xf32, #tpu.memory_space<vmem>>, vector<16x16xf32>,
    %c0_9 = arith.constant 0 : index
    %c0_10 = arith.constant 0 : index
    %8 = vector.load %arg11[%c0_9, %c0_10] : memref<48x16xf32, #tpu.memory_space<vmem>>, vector<48x16xf32>
    %c0_11 = arith.constant 0 : index
    %c0_12 = arith.constant 0 : index
    %9 = vector.load %arg1[%c0_11, %c0_12] : memref<48x1xf32, #tpu.memory_space<vmem>>, vector<48x1xf32>
    %c1_i32 = arith.constant 1 : i32
    %10 = tpu.dynamic_rotate %8 by %c1_i32 dim 0 : vector<48x16xf32>, i32 -> vector<48x16xf32>
    %c47_i32 = arith.constant 47 : i32
    %11 = tpu.dynamic_rotate %8 by %c47_i32 dim 0 : vector<48x16xf32>, i32 -> vector<48x16xf32>
    %12 = tpu.concatenate %10, %8, %11 in 1 : vector<48x16xf32>, vector<48x16xf32>, vector<48x16xf32> -> vector<48x48xf32>
    %c0_13 = arith.constant 0 : index
    %c0_14 = arith.constant 0 : index
    %13 = vector.load %arg2[%c0_13, %c0_14] : memref<48x16xf32, #tpu.memory_space<vmem>>, vector<48x16xf32>
    %cst_15 = arith.constant dense<0.000000e+00> : vector<48x16xf32>
    %14 = tpu.matmul %12, %13, %cst_15 {dimension_numbers = #tpu.dot_dimension_numbers<[1], [0], [0], [1], [0, 0, 1, 1], [], []>} : vector<48x48xf32>, vector<48x16xf32>, vector<48x16xf32> -> vector<48x16xf32>
    %c0_16 = arith.constant 0 : index
    %c0_17 = arith.constant 0 : index
    %15 = vector.load %arg3[%c0_16, %c0_17] : memref<1x16xf32, #tpu.memory_space<vmem>>, vector<1x16xf32>
    %16 = vector.broadcast %15 : vector<1x16xf32> to vector<48x16xf32>
    %17 = arith.addf %14, %16 : vector<48x16xf32>
    %18 = vector.broadcast %9 : vector<48x1xf32> to vector<48x16xf32>
    %19 = arith.mulf %17, %18 : vector<48x16xf32>
    %cst_18 = arith.constant dense<0.000000e+00> : vector<16xf32>
    %20 = vector.multi_reduction <add>, %19, %cst_18 [0] : vector<48x16xf32> to vector<16xf32>
    %21 = vector.shape_cast %20 : vector<16xf32> to vector<1x16xf32>
    %cst_19 = arith.constant 3.125000e-02 : f32
    %22 = vector.broadcast %cst_19 : f32 to vector<1x16xf32>
    %23 = arith.mulf %21, %22 : vector<1x16xf32>
    %24 = vector.broadcast %23 : vector<1x16xf32> to vector<48x16xf32>
    %25 = arith.subf %19, %24 : vector<48x16xf32>
    %26 = vector.broadcast %9 : vector<48x1xf32> to vector<48x16xf32>
    %27 = arith.mulf %25, %26 : vector<48x16xf32>
    %28 = arith.mulf %27, %27 : vector<48x16xf32>
    %cst_20 = arith.constant dense<0.000000e+00> : vector<16xf32>
    %29 = vector.multi_reduction <add>, %28, %cst_20 [0] : vector<48x16xf32> to vector<16xf32>
    %30 = vector.shape_cast %29 : vector<16xf32> to vector<1x16xf32>
    %cst_21 = arith.constant 3.125000e-02 : f32
    %31 = vector.broadcast %cst_21 : f32 to vector<1x16xf32>
    %32 = arith.mulf %30, %31 : vector<1x16xf32>
    %cst_22 = arith.constant 9.99999974E-6 : f32
    %33 = vector.broadcast %cst_22 : f32 to vector<1x16xf32>
    %34 = arith.addf %32, %33 : vector<1x16xf32>
    %35 = math.rsqrt %34 : vector<1x16xf32>
    %c0_23 = arith.constant 0 : index
    %c0_24 = arith.constant 0 : index
    %36 = vector.load %arg4[%c0_23, %c0_24] : memref<1x16xf32, #tpu.memory_space<vmem>>, vector<1x16xf32>
    %37 = arith.mulf %35, %36 : vector<1x16xf32>
    %38 = vector.broadcast %37 : vector<1x16xf32> to vector<48x16xf32>
    %39 = arith.mulf %27, %38 : vector<48x16xf32>
    %c0_25 = arith.constant 0 : index
    %c0_26 = arith.constant 0 : index
    %40 = vector.load %arg5[%c0_25, %c0_26] : memref<1x16xf32, #tpu.memory_space<vmem>>, vector<1x16xf32>
    %41 = vector.broadcast %40 : vector<1x16xf32> to vector<48x16xf32>
    %42 = arith.addf %39, %41 : vector<48x16xf32>
    %cst_27 = arith.constant 0.000000e+00 : f32
    %43 = vector.broadcast %cst_27 : f32 to vector<48x16xf32>
    %44 = arith.maximumf %42, %43 : vector<48x16xf32>
    %45 = vector.broadcast %9 : vector<48x1xf32> to vector<48x16xf32>
    %46 = arith.mulf %44, %45 : vector<48x16xf32>
    %c1_i32_28 = arith.constant 1 : i32
    %47 = tpu.dynamic_rotate %46 by %c1_i32_28 dim 0 : vector<48x16xf32>, i32 -> vector<48x16xf32>
    %c47_i32_29 = arith.constant 47 : i32
    %48 = tpu.dynamic_rotate %46 by %c47_i32_29 dim 0 : vector<48x16xf32>, i32 -> vector<48x16xf32>
    %49 = tpu.concatenate %47, %46, %48 in 1 : vector<48x16xf32>, vector<48x16xf32>, vector<48x16xf32> -> vector<48x48xf32>
    %c0_30 = arith.constant 0 : index
    %c0_31 = arith.constant 0 : index
    %50 = vector.load %arg6[%c0_30, %c0_31] : memref<48x16xf32, #tpu.memory_space<vmem>>, vector<48x16xf32>
    %cst_32 = arith.constant dense<0.000000e+00> : vector<48x16xf32>
    %51 = tpu.matmul %49, %50, %cst_32 {dimension_numbers = #tpu.dot_dimension_numbers<[1], [0], [0], [1], [0, 0, 1, 1], [], []>} : vector<48x48xf32>, vector<48x16xf32>, vector<48x16xf32> -> vector<48x16xf32>
    %c0_33 = arith.constant 0 : index
    %c0_34 = arith.constant 0 : index
    %52 = vector.load %arg7[%c0_33, %c0_34] : memref<1x16xf32, #tpu.memory_space<vmem>>, vector<1x16xf32>
    %53 = vector.broadcast %52 : vector<1x16xf32> to vector<48x16xf32>
    %54 = arith.addf %51, %53 : vector<48x16xf32>
    %55 = vector.broadcast %9 : vector<48x1xf32> to vector<48x16xf32>
    %56 = arith.mulf %54, %55 : vector<48x16xf32>
    %cst_35 = arith.constant dense<0.000000e+00> : vector<16xf32>
    %57 = vector.multi_reduction <add>, %56, %cst_35 [0] : vector<48x16xf32> to vector<16xf32>
    %58 = vector.shape_cast %57 : vector<16xf32> to vector<1x16xf32>
    %cst_36 = arith.constant 3.125000e-02 : f32
    %59 = vector.broadcast %cst_36 : f32 to vector<1x16xf32>
    %60 = arith.mulf %58, %59 : vector<1x16xf32>
    %61 = vector.broadcast %60 : vector<1x16xf32> to vector<48x16xf32>
    %62 = arith.subf %56, %61 : vector<48x16xf32>
    %63 = vector.broadcast %9 : vector<48x1xf32> to vector<48x16xf32>
    %64 = arith.mulf %62, %63 : vector<48x16xf32>
    %65 = arith.mulf %64, %64 : vector<48x16xf32>
    %cst_37 = arith.constant dense<0.000000e+00> : vector<16xf32>
    %66 = vector.multi_reduction <add>, %65, %cst_37 [0] : vector<48x16xf32> to vector<16xf32>
    %67 = vector.shape_cast %66 : vector<16xf32> to vector<1x16xf32>
    %cst_38 = arith.constant 3.125000e-02 : f32
    %68 = vector.broadcast %cst_38 : f32 to vector<1x16xf32>
    %69 = arith.mulf %67, %68 : vector<1x16xf32>
    %cst_39 = arith.constant 9.99999974E-6 : f32
    %70 = vector.broadcast %cst_39 : f32 to vector<1x16xf32>
    %71 = arith.addf %69, %70 : vector<1x16xf32>
    %72 = math.rsqrt %71 : vector<1x16xf32>
    %c0_40 = arith.constant 0 : index
    %c0_41 = arith.constant 0 : index
    %73 = vector.load %arg8[%c0_40, %c0_41] : memref<1x16xf32, #tpu.memory_space<vmem>>, vector<1x16xf32>
    %74 = arith.mulf %72, %73 : vector<1x16xf32>
    %75 = vector.broadcast %74 : vector<1x16xf32> to vector<48x16xf32>
    %76 = arith.mulf %64, %75 : vector<48x16xf32>
    %c0_42 = arith.constant 0 : index
    %c0_43 = arith.constant 0 : index
    %77 = vector.load %arg9[%c0_42, %c0_43] : memref<1x16xf32, #tpu.memory_space<vmem>>, vector<1x16xf32>
    %78 = vector.broadcast %77 : vector<1x16xf32> to vector<48x16xf32>
    %79 = arith.addf %76, %78 : vector<48x16xf32>
    %80 = arith.addf %79, %8 : vector<48x16xf32>
    %cst_44 = arith.constant 0.000000e+00 : f32
    %81 = vector.broadcast %cst_44 : f32 to vector<48x16xf32>
    %82 = arith.maximumf %80, %81 : vector<48x16xf32>
    %c0_45 = arith.constant 0 : index
    %c0_46 = arith.constant 0 : index
    %83 = vector.load %arg10[%c0_45, %c0_46] : memref<48x16xf32, #tpu.memory_space<vmem>>, vector<48x16xf32>
    tpu.vector_store %arg10[%c0_45, %c0_46], %82 {strides = array<i32>} : memref<48x16xf32, #tpu.memory_space<vmem>>, vector<48x16xf32>,
    return
  }
}

</mosaic_0001>

<llo_original>
// kernel: tpu_custom_call.1
$region0: #{tpu_custom_call.1}
  #allocation0 [shape = 'u32[]', space=smem, size = 0x4, offset = 0x4, fixed_abs, tag = 'smem constant byte address 0x4 - core index']
  #allocation1 [shape = 'u32[144,128]{1,0:T(1,128)}', space=vmem, size = 0x12000, scoped, tag = 'internal scratch']
  #allocation2 [shape = 'f32[48,16]{1,0:T(8,128)}', space=vmem, size = 0x6000, scoped, tag = 'scratch operand']
  %s0 = inlined_call_operand.vmem [shape: f32[2,16,16], index: 0, kind: input, shape index: {}]
  %s1 = inlined_call_operand.vmem [shape: f32[48,1], index: 1, kind: input, shape index: {}]
  %s2 = inlined_call_operand.vmem [shape: f32[48,16], index: 2, kind: input, shape index: {}]
  %s3 = inlined_call_operand.vmem [shape: f32[1,16], index: 3, kind: input, shape index: {}]
  %s4 = inlined_call_operand.vmem [shape: f32[1,16], index: 4, kind: input, shape index: {}]
  %s5 = inlined_call_operand.vmem [shape: f32[1,16], index: 5, kind: input, shape index: {}]
  %s6 = inlined_call_operand.vmem [shape: f32[48,16], index: 6, kind: input, shape index: {}]
  %s7 = inlined_call_operand.vmem [shape: f32[1,16], index: 7, kind: input, shape index: {}]
  %s8 = inlined_call_operand.vmem [shape: f32[1,16], index: 8, kind: input, shape index: {}]
  %s9 = inlined_call_operand.vmem [shape: f32[1,16], index: 9, kind: input, shape index: {}]
  %s10 = inlined_call_operand.vmem [shape: f32[48,16], index: 10, kind: output, shape index: {}]
  %s11 = sld [smem:[#allocation0]]
  $region50: #{tpu_custom_call.1} parent=0
    _
  %s13 = ssub.s32 1, %s11
  %s14 = scalar_select 0, %s13, %s11
  // Predicated region
  $region2: #{tpu_custom_call.1} parent=0 // pred_check
    _
  $region3: #{tpu_custom_call.1} parent=0 // pred_check_branch
    %16 = sbr.rel (0) target = $region5
  $region4: #{tpu_custom_call.1} parent=0 // pred_region
    _
  $region5: #{tpu_custom_call.1} parent=0 // pred_fallthru
    _
  // Predicated region
  $region6: #{tpu_custom_call.1} parent=0 // pred_check
    _
  $region7: #{tpu_custom_call.1} parent=0 // pred_check_branch
    %18 = sbr.rel (0) target = $region9
  $region8: #{tpu_custom_call.1} parent=0 // pred_region
    _
  $region9: #{tpu_custom_call.1} parent=0 // pred_fallthru
    _
  // Predicated region
  $region10: #{tpu_custom_call.1} parent=0 // pred_check
    _
  $region11: #{tpu_custom_call.1} parent=0 // pred_check_branch
    %20 = sbr.rel (0) target = $region13
  $region12: #{tpu_custom_call.1} parent=0 // pred_region
    _
  $region13: #{tpu_custom_call.1} parent=0 // pred_fallthru
    _
  // Predicated region
  $region14: #{tpu_custom_call.1} parent=0 // pred_check
    _
  $region15: #{tpu_custom_call.1} parent=0 // pred_check_branch
    %22 = sbr.rel (0) target = $region17
  $region16: #{tpu_custom_call.1} parent=0 // pred_region
    _
  $region17: #{tpu_custom_call.1} parent=0 // pred_fallthru
    _
  // Predicated region
  $region18: #{tpu_custom_call.1} parent=0 // pred_check
    _
  $region19: #{tpu_custom_call.1} parent=0 // pred_check_branch
    %24 = sbr.rel (0) target = $region21
  $region20: #{tpu_custom_call.1} parent=0 // pred_region
    _
  $region21: #{tpu_custom_call.1} parent=0 // pred_fallthru
    _
  // Predicated region
  $region22: #{tpu_custom_call.1} parent=0 // pred_check
    _
  $region23: #{tpu_custom_call.1} parent=0 // pred_check_branch
    %26 = sbr.rel (0) target = $region25
  $region24: #{tpu_custom_call.1} parent=0 // pred_region
    _
  $region25: #{tpu_custom_call.1} parent=0 // pred_fallthru
    _
  // Predicated region
  $region26: #{tpu_custom_call.1} parent=0 // pred_check
    _
  $region27: #{tpu_custom_call.1} parent=0 // pred_check_branch
    %28 = sbr.rel (0) target = $region29
  $region28: #{tpu_custom_call.1} parent=0 // pred_region
    _
  $region29: #{tpu_custom_call.1} parent=0 // pred_fallthru
    _
  // Predicated region
  $region30: #{tpu_custom_call.1} parent=0 // pred_check
    _
  $region31: #{tpu_custom_call.1} parent=0 // pred_check_branch
    %30 = sbr.rel (0) target = $region33
  $region32: #{tpu_custom_call.1} parent=0 // pred_region
    _
  $region33: #{tpu_custom_call.1} parent=0 // pred_fallthru
    _
  // Predicated region
  $region34: #{tpu_custom_call.1} parent=0 // pred_check
    _
  $region35: #{tpu_custom_call.1} parent=0 // pred_check_branch
    %32 = sbr.rel (0) target = $region37
  $region36: #{tpu_custom_call.1} parent=0 // pred_region
    _
  $region37: #{tpu_custom_call.1} parent=0 // pred_fallthru
    _
  // Predicated region
  $region38: #{tpu_custom_call.1} parent=0 // pred_check
    _
  $region39: #{tpu_custom_call.1} parent=0 // pred_check_branch
    %34 = sbr.rel (0) target = $region41
  $region40: #{tpu_custom_call.1} parent=0 // pred_region
    _
  $region41: #{tpu_custom_call.1} parent=0 // pred_fallthru
    _
  %vm35 = vcmask 130048
  %36 = vst.msk [vmem:[#allocation2] sm:$0xff] %vm35, 0.0
  %37 = vst.msk [vmem:[#allocation2 + $0x8] sm:$0xff] %vm35, 0.0
  %38 = vst.msk [vmem:[#allocation2 + $0x10] sm:$0xff] %vm35, 0.0
  %39 = vst.msk [vmem:[#allocation2 + $0x18] sm:$0xff] %vm35, 0.0
  %40 = vst.msk [vmem:[#allocation2 + $0x20] sm:$0xff] %vm35, 0.0
  %41 = vst.msk [vmem:[#allocation2 + $0x28] sm:$0xff] %vm35, 0.0
  %v42 = vld [vmem:[%s0] sm:$0xff]
  %v43 = vld [vmem:[%s0 + $0x8] sm:$0xff]
  %44 = vst.msk [vmem:[#allocation2] sm:$0xff] %vm35, %v42
  %45 = vst.msk [vmem:[#allocation2 + $0x8] sm:$0xff] %vm35, %v43
  %s46 = scalar_lea.vmem %s0, 16
  %v47 = vld [vmem:[%s46] sm:$0xff]
  %v48 = vld [vmem:[%s46 + $0x8] sm:$0xff]
  %49 = vst.msk [vmem:[#allocation2 + $0x18] sm:$0xff] %vm35, %v47
  %50 = vst.msk [vmem:[#allocation2 + $0x20] sm:$0xff] %vm35, %v48
  %v51 = vld [vmem:[#allocation2] sm:$0xff]
  %v52 = vld [vmem:[#allocation2 + $0x8] sm:$0xff]
  %v53 = vld [vmem:[#allocation2 + $0x10] sm:$0xff]
  %v54 = vld [vmem:[#allocation2 + $0x18] sm:$0xff]
  %v55 = vld [vmem:[#allocation2 + $0x20] sm:$0xff]
  %v56 = vld [vmem:[#allocation2 + $0x28] sm:$0xff]
  %v57 = vld [vmem:[%s1] sm:$0xff]
  %v58 = vld [vmem:[%s1 + $0x8] sm:$0xff]
  %v59 = vld [vmem:[%s1 + $0x10] sm:$0xff]
  %v60 = vld [vmem:[%s1 + $0x18] sm:$0xff]
  %v61 = vld [vmem:[%s1 + $0x20] sm:$0xff]
  %v62 = vld [vmem:[%s1 + $0x28] sm:$0xff]
  %v63 = vrot.slane %v51, 7
  %v64 = vrot.slane %v52, 7
  %v65 = vrot.slane %v53, 7
  %v66 = vrot.slane %v54, 7
  %v67 = vrot.slane %v55, 7
  %v68 = vrot.slane %v56, 7
  %v69 = vlaneseq
  %v70 = vshrl.u32 %v69, 7
  %vm71 = vcmp.lt.s32.totalorder %v70, 1
  %v72 = vsel %vm71, %v67, %v68
  %v73 = vsel %vm71, %v66, %v67
  %v74 = vsel %vm71, %v65, %v66
  %v75 = vsel %vm71, %v64, %v65
  %v76 = vsel %vm71, %v63, %v64
  %v77 = vsel %vm71, %v68, %v63
  %v78 = vrot.slane %v51, 1
  %v79 = vrot.slane %v52, 1
  %v80 = vrot.slane %v53, 1
  %v81 = vrot.slane %v54, 1
  %v82 = vrot.slane %v55, 1
  %v83 = vrot.slane %v56, 1
  %vm84 = vcmp.lt.s32.totalorder %v70, 7
  %v85 = vsel %vm84, %v82, %v83
  %v86 = vsel %vm84, %v81, %v82
  %v87 = vsel %vm84, %v80, %v81
  %v88 = vsel %vm84, %v79, %v80
  %v89 = vsel %vm84, %v78, %v79
  %v90 = vsel %vm84, %v83, %v78
  %97 = vrot.lane.b32.xlu0 %v51, 16
  %v98 = vpop.permute.xlu0 %97
  %99 = vrot.lane.b32.xlu0 %v52, 16
  %v100 = vpop.permute.xlu0 %99
  %101 = vrot.lane.b32.xlu0 %v53, 16
  %v102 = vpop.permute.xlu0 %101
  %103 = vrot.lane.b32.xlu0 %v54, 16
  %v104 = vpop.permute.xlu0 %103
  %105 = vrot.lane.b32.xlu0 %v55, 16
  %v106 = vpop.permute.xlu0 %105
  %107 = vrot.lane.b32.xlu0 %v56, 16
  %v108 = vpop.permute.xlu0 %107
  %121 = vrot.lane.b32.xlu0 %v89, 32
  %v122 = vpop.permute.xlu0 %121
  %123 = vrot.lane.b32.xlu0 %v88, 32
  %v124 = vpop.permute.xlu0 %123
  %125 = vrot.lane.b32.xlu0 %v87, 32
  %v126 = vpop.permute.xlu0 %125
  %127 = vrot.lane.b32.xlu0 %v86, 32
  %v128 = vpop.permute.xlu0 %127
  %129 = vrot.lane.b32.xlu0 %v85, 32
  %v130 = vpop.permute.xlu0 %129
  %131 = vrot.lane.b32.xlu0 %v90, 32
  %v132 = vpop.permute.xlu0 %131
  %v139 = vsel %vm35, %v77, %v98
  %v140 = vsel %vm35, %v76, %v100
  %v141 = vsel %vm35, %v75, %v102
  %v142 = vsel %vm35, %v74, %v104
  %v143 = vsel %vm35, %v73, %v106
  %v144 = vsel %vm35, %v72, %v108
  %vm145 = vcmask 261120
  %v146 = vsel %vm145, %v139, %v122
  %v147 = vsel %vm145, %v140, %v124
  %v148 = vsel %vm145, %v141, %v126
  %v149 = vsel %vm145, %v142, %v128
  %v150 = vsel %vm145, %v143, %v130
  %v151 = vsel %vm145, %v144, %v132
  %v152 = vld [vmem:[%s2] sm:$0xff]
  %v153 = vld [vmem:[%s2 + $0x8] sm:$0xff]
  %v154 = vld [vmem:[%s2 + $0x10] sm:$0xff]
  %v155 = vld [vmem:[%s2 + $0x18] sm:$0xff]
  %v156 = vld [vmem:[%s2 + $0x20] sm:$0xff]
  %v157 = vld [vmem:[%s2 + $0x28] sm:$0xff]
  %v158 = vld [vmem:[%s3] sm:$0x1]
  %v160 = vlaneseq
  %v161 = vshrl.u32 %v160, 7
  %v162 = vsub.s32 0, %v161
  %v163 = vrot.slane %v158, %v162
  %vm165 = vcmask 392192
  %v167 = vsel %vm165, %v146, 0
  %v170 = vsel %vm165, %v147, 0
  %v173 = vsel %vm165, %v148, 0
  %v176 = vsel %vm165, %v149, 0
  %v179 = vsel %vm165, %v150, 0
  %v182 = vsel %vm165, %v151, 0
  %184 = vmatprep.subr.mxu0 0.0
  %185 = vmatpush1.msra.mxu0 %v152
  %186 = vmatprep.subr.mxu0 0.0
  %187 = vmatpush1.msra.mxu0 %v153
  %188 = vmatprep.subr.mxu0 0.0
  %189 = vmatpush1.msra.mxu0 %v154
  %190 = vmatprep.subr.mxu0 0.0
  %191 = vmatpush1.msra.mxu0 %v155
  %192 = vmatprep.subr.mxu0 0.0
  %193 = vmatpush1.msra.mxu0 %v156
  %194 = vmatprep.subr.mxu0 0.0
  %195 = vmatpush1.msra.mxu0 %v157
  %196 = vmatprep.subr.mxu0 0.0
  %197 = vmatpush1.msra.mxu0 0.0
  %198 = vmatprep.subr.mxu0 0.0
  %199 = vmatpush1.msra.mxu0 0.0
  %200 = vmatprep.subr.mxu0 0.0
  %201 = vmatpush1.msra.mxu0 0.0
  %202 = vmatprep.subr.mxu0 0.0
  %203 = vmatpush1.msra.mxu0 0.0
  %204 = vmatprep.subr.mxu0 0.0
  %205 = vmatpush1.msra.mxu0 0.0
  %206 = vmatprep.subr.mxu0 0.0
  %207 = vmatpush1.msra.mxu0 0.0
  %208 = vmatprep.subr.mxu0 0.0
  %209 = vmatpush1.msra.mxu0 0.0
  %210 = vmatprep.subr.mxu0 0.0
  %211 = vmatpush1.msra.mxu0 0.0
  %212 = vmatprep.subr.mxu0 0.0
  %213 = vmatpush1.msra.mxu0 0.0
  %214 = vmatprep.subr.mxu0 0.0
  %215 = vmatpush1.msra.mxu0 0.0
  %216 = vmatprep.subr.mxu0 0.0
  %217 = vmatpush1.msra.mxu0 0.0
  %218 = vmatprep.subr.mxu0 0.0
  %219 = vmatpush1.msra.mxu0 0.0
  %220 = vmatprep.subr.mxu0 0.0
  %221 = vmatpush1.msra.mxu0 0.0
  %222 = vmatprep.subr.mxu0 0.0
  %223 = vmatpush1.msra.mxu0 0.0
  %224 = vmatprep.subr.mxu0 0.0
  %225 = vmatpush1.msra.mxu0 0.0
  %226 = vmatprep.subr.mxu0 0.0
  %227 = vmatpush1.msra.mxu0 0.0
  %228 = vmatprep.subr.mxu0 0.0
  %229 = vmatpush1.msra.mxu0 0.0
  %230 = vmatprep.subr.mxu0 0.0
  %231 = vmatpush1.msra.mxu0 0.0
  %232 = vmatprep.subr.mxu0 0.0
  %233 = vmatpush1.msra.mxu0 0.0
  %234 = vmatprep.subr.mxu0 0.0
  %235 = vmatpush1.msra.mxu0 0.0
  %236 = vmatprep.subr.mxu0 0.0
  %237 = vmatpush1.msra.mxu0 0.0
  %238 = vmatprep.subr.mxu0 0.0
  %239 = vmatpush1.msra.mxu0 0.0
  %240 = vmatprep.subr.mxu0 0.0
  %241 = vmatpush1.msra.mxu0 0.0
  %242 = vmatprep.subr.mxu0 0.0
  %243 = vmatpush1.msra.mxu0 0.0
  %244 = vmatprep.subr.mxu0 0.0
  %245 = vmatpush1.msra.mxu0 0.0
  %246 = vmatprep.subr.mxu0 0.0
  %247 = vmatpush1.msra.mxu0 0.0
  %248 = vmatprep.mubr.f32.mxu0 0.0
  %249 = vmatmul.mubr.f32.gmra.mrb[0].mxu0 %v167
  %v250 = vpop.f32.mrb[0].mxu0
  %v251 = vadd.f32 %v163, %v250
  %v252 = vpop.f32.mrb[0].mxu0
  %253 = vmatprep.mubr.f32.mxu0 0.0
  %254 = vmatmul.mubr.f32.gmra.mrb[0].mxu0 %v170
  %v255 = vpop.f32.mrb[0].mxu0
  %v256 = vadd.f32 %v163, %v255
  %v257 = vpop.f32.mrb[0].mxu0
  %258 = vmatprep.mubr.f32.mxu0 0.0
  %259 = vmatmul.mubr.f32.gmra.mrb[0].mxu0 %v173
  %v260 = vpop.f32.mrb[0].mxu0
  %v261 = vadd.f32 %v163, %v260
  %v262 = vpop.f32.mrb[0].mxu0
  %263 = vmatprep.mubr.f32.mxu0 0.0
  %264 = vmatmul.mubr.f32.gmra.mrb[0].mxu0 %v176
  %v265 = vpop.f32.mrb[0].mxu0
  %v266 = vadd.f32 %v163, %v265
  %v267 = vpop.f32.mrb[0].mxu0
  %268 = vmatprep.mubr.f32.mxu0 0.0
  %269 = vmatmul.mubr.f32.gmra.mrb[0].mxu0 %v179
  %v270 = vpop.f32.mrb[0].mxu0
  %v271 = vadd.f32 %v163, %v270
  %v272 = vpop.f32.mrb[0].mxu0
  %273 = vmatprep.mubr.f32.mxu0 0.0
  %274 = vmatmul.mubr.f32.gmra.mrb[0].mxu0 %v182
  %v275 = vpop.f32.mrb[0].mxu0
  %v276 = vadd.f32 %v163, %v275
  %v277 = vpop.f32.mrb[0].mxu0
  %278 = vdwg.mxu0
  %280 = vset.pattern.permute.xlu0 0
  %281 = vperm.xlu0 %280, %v57
  %v282 = vpop.permute.xlu0 %281
  %285 = vset.pattern.permute.xlu0 0
  %286 = vperm.xlu0 %285, %v58
  %v287 = vpop.permute.xlu0 %286
  %290 = vset.pattern.permute.xlu0 0
  %291 = vperm.xlu0 %290, %v59
  %v292 = vpop.permute.xlu0 %291
  %295 = vset.pattern.permute.xlu0 0
  %296 = vperm.xlu0 %295, %v60
  %v297 = vpop.permute.xlu0 %296
  %300 = vset.pattern.permute.xlu0 0
  %301 = vperm.xlu0 %300, %v61
  %v302 = vpop.permute.xlu0 %301
  %305 = vset.pattern.permute.xlu0 0
  %306 = vperm.xlu0 %305, %v62
  %v307 = vpop.permute.xlu0 %306
  %v309 = vmul.f32 %v251, %v282
  %v310 = vmul.f32 %v256, %v287
  %v311 = vmul.f32 %v261, %v292
  %v312 = vmul.f32 %v266, %v297
  %v313 = vmul.f32 %v271, %v302
  %v314 = vmul.f32 %v276, %v307
  %v315 = vsel %vm35, %v309, 0.0
  %v316 = vsel %vm35, %v310, 0.0
  %v317 = vadd.f32 %v315, %v316
  %v318 = vsel %vm35, %v311, 0.0
  %v319 = vadd.f32 %v317, %v318
  %v320 = vsel %vm35, %v312, 0.0
  %v321 = vadd.f32 %v319, %v320
  %v322 = vsel %vm35, %v313, 0.0
  %v323 = vadd.f32 %v321, %v322
  %v324 = vsel %vm35, %v314, 0.0
  %v325 = vadd.f32 %v323, %v324
  %v326 = vrot.slane %v325, 4
  %v327 = vadd.f32 %v325, %v326
  %v328 = vrot.slane %v327, 2
  %v329 = vadd.f32 %v327, %v328
  %v330 = vrot.slane %v329, 1
  %v331 = vadd.f32 %v329, %v330
  %v332 = vmul.f32 %v331, 0.03125
  %v333 = vsub.f32 %v309, %v332
  %v334 = vsub.f32 %v310, %v332
  %v335 = vsub.f32 %v311, %v332
  %v336 = vsub.f32 %v312, %v332
  %v337 = vsub.f32 %v313, %v332
  %v338 = vsub.f32 %v314, %v332
  %v339 = vmul.f32 %v333, %v282
  %v340 = vmul.f32 %v334, %v287
  %v341 = vmul.f32 %v335, %v292
  %v342 = vmul.f32 %v336, %v297
  %v343 = vmul.f32 %v337, %v302
  %v344 = vmul.f32 %v338, %v307
  %v345 = vmul.f32 %v339, %v339
  %v346 = vmul.f32 %v340, %v340
  %v347 = vmul.f32 %v341, %v341
  %v348 = vmul.f32 %v342, %v342
  %v349 = vmul.f32 %v343, %v343
  %v350 = vmul.f32 %v344, %v344
  %v351 = vsel %vm35, %v345, 0.0
  %v352 = vsel %vm35, %v346, 0.0
  %v353 = vadd.f32 %v351, %v352
  %v354 = vsel %vm35, %v347, 0.0
  %v355 = vadd.f32 %v353, %v354
  %v356 = vsel %vm35, %v348, 0.0
  %v357 = vadd.f32 %v355, %v356
  %v358 = vsel %vm35, %v349, 0.0
  %v359 = vadd.f32 %v357, %v358
  %v360 = vsel %vm35, %v350, 0.0
  %v361 = vadd.f32 %v359, %v360
  %v362 = vrot.slane %v361, 4
  %v363 = vadd.f32 %v361, %v362
  %v364 = vrot.slane %v363, 2
  %v365 = vadd.f32 %v363, %v364
  %v366 = vrot.slane %v365, 1
  %v367 = vadd.f32 %v365, %v366
  %v368 = vmul.f32 %v367, 0.03125
  %v369 = vadd.f32 %v368, 1e-05
  %v370 = vrsqrt.pop %v369
  %v371 = vld [vmem:[%s4] sm:$0x1]
  %v372 = vmul.f32 %v370, %v371
  %v373 = vlaneseq
  %v374 = vshrl.u32 %v373, 7
  %v375 = vsub.s32 0, %v374
  %v376 = vrot.slane %v372, %v375
  %v377 = vmul.f32 %v339, %v376
  %v378 = vmul.f32 %v340, %v376
  %v379 = vmul.f32 %v341, %v376
  %v380 = vmul.f32 %v342, %v376
  %v381 = vmul.f32 %v343, %v376
  %v382 = vmul.f32 %v344, %v376
  %v383 = vld [vmem:[%s5] sm:$0x1]
  %v385 = vlaneseq
  %v386 = vshrl.u32 %v385, 7
  %v387 = vsub.s32 0, %v386
  %v388 = vrot.slane %v383, %v387
  %v390 = vadd.f32 %v377, %v388
  %v391 = vadd.f32 %v378, %v388
  %v392 = vadd.f32 %v379, %v388
  %v393 = vadd.f32 %v380, %v388
  %v394 = vadd.f32 %v381, %v388
  %v395 = vadd.f32 %v382, %v388
  %v396 = vmax.f32 %v390, 0.0
  %v397 = vmax.f32 %v391, 0.0
  %v398 = vmax.f32 %v392, 0.0
  %v399 = vmax.f32 %v393, 0.0
  %v400 = vmax.f32 %v394, 0.0
  %v401 = vmax.f32 %v395, 0.0
  %v402 = vmul.f32 %v396, %v282
  %v403 = vmul.f32 %v397, %v287
  %v404 = vmul.f32 %v398, %v292
  %v405 = vmul.f32 %v399, %v297
  %v406 = vmul.f32 %v400, %v302
  %v407 = vmul.f32 %v401, %v307
  %v408 = vrot.slane %v402, 7
  %v409 = vrot.slane %v403, 7
  %v410 = vrot.slane %v404, 7
  %v411 = vrot.slane %v405, 7
  %v412 = vrot.slane %v406, 7
  %v413 = vrot.slane %v407, 7
  %v414 = vsel %vm71, %v412, %v413
  %v415 = vsel %vm71, %v411, %v412
  %v416 = vsel %vm71, %v410, %v411
  %v417 = vsel %vm71, %v409, %v410
  %v418 = vsel %vm71, %v408, %v409
  %v419 = vsel %vm71, %v413, %v408
  %v420 = vrot.slane %v402, 1
  %v421 = vrot.slane %v403, 1
  %v422 = vrot.slane %v404, 1
  %v423 = vrot.slane %v405, 1
  %v424 = vrot.slane %v406, 1
  %v425 = vrot.slane %v407, 1
  %v426 = vsel %vm84, %v424, %v425
  %v427 = vsel %vm84, %v423, %v424
  %v428 = vsel %vm84, %v422, %v423
  %v429 = vsel %vm84, %v421, %v422
  %v430 = vsel %vm84, %v420, %v421
  %v431 = vsel %vm84, %v425, %v420
  %438 = vrot.lane.b32.xlu0 %v402, 16
  %v439 = vpop.permute.xlu0 %438
  %440 = vrot.lane.b32.xlu0 %v403, 16
  %v441 = vpop.permute.xlu0 %440
  %442 = vrot.lane.b32.xlu0 %v404, 16
  %v443 = vpop.permute.xlu0 %442
  %444 = vrot.lane.b32.xlu0 %v405, 16
  %v445 = vpop.permute.xlu0 %444
  %446 = vrot.lane.b32.xlu0 %v406, 16
  %v447 = vpop.permute.xlu0 %446
  %448 = vrot.lane.b32.xlu0 %v407, 16
  %v449 = vpop.permute.xlu0 %448
  %462 = vrot.lane.b32.xlu0 %v430, 32
  %v463 = vpop.permute.xlu0 %462
  %464 = vrot.lane.b32.xlu0 %v429, 32
  %v465 = vpop.permute.xlu0 %464
  %466 = vrot.lane.b32.xlu0 %v428, 32
  %v467 = vpop.permute.xlu0 %466
  %468 = vrot.lane.b32.xlu0 %v427, 32
  %v469 = vpop.permute.xlu0 %468
  %470 = vrot.lane.b32.xlu0 %v426, 32
  %v471 = vpop.permute.xlu0 %470
  %472 = vrot.lane.b32.xlu0 %v431, 32
  %v473 = vpop.permute.xlu0 %472
  %v480 = vsel %vm35, %v419, %v439
  %v481 = vsel %vm35, %v418, %v441
  %v482 = vsel %vm35, %v417, %v443
  %v483 = vsel %vm35, %v416, %v445
  %v484 = vsel %vm35, %v415, %v447
  %v485 = vsel %vm35, %v414, %v449
  %v486 = vsel %vm145, %v480, %v463
  %v487 = vsel %vm145, %v481, %v465
  %v488 = vsel %vm145, %v482, %v467
  %v489 = vsel %vm145, %v483, %v469
  %v490 = vsel %vm145, %v484, %v471
  %v491 = vsel %vm145, %v485, %v473
  %v492 = vld [vmem:[%s6] sm:$0xff]
  %v493 = vld [vmem:[%s6 + $0x8] sm:$0xff]
  %v494 = vld [vmem:[%s6 + $0x10] sm:$0xff]
  %v495 = vld [vmem:[%s6 + $0x18] sm:$0xff]
  %v496 = vld [vmem:[%s6 + $0x20] sm:$0xff]
  %v497 = vld [vmem:[%s6 + $0x28] sm:$0xff]
  %v498 = vld [vmem:[%s7] sm:$0x1]
  %v500 = vlaneseq
  %v501 = vshrl.u32 %v500, 7
  %v502 = vsub.s32 0, %v501
  %v503 = vrot.slane %v498, %v502
  %v506 = vsel %vm165, %v486, 0
  %v509 = vsel %vm165, %v487, 0
  %v512 = vsel %vm165, %v488, 0
  %v515 = vsel %vm165, %v489, 0
  %v518 = vsel %vm165, %v490, 0
  %v521 = vsel %vm165, %v491, 0
  %523 = vmatprep.subr.mxu0 0.0
  %524 = vmatpush1.msra.mxu0 %v492
  %525 = vmatprep.subr.mxu0 0.0
  %526 = vmatpush1.msra.mxu0 %v493
  %527 = vmatprep.subr.mxu0 0.0
  %528 = vmatpush1.msra.mxu0 %v494
  %529 = vmatprep.subr.mxu0 0.0
  %530 = vmatpush1.msra.mxu0 %v495
  %531 = vmatprep.subr.mxu0 0.0
  %532 = vmatpush1.msra.mxu0 %v496
  %533 = vmatprep.subr.mxu0 0.0
  %534 = vmatpush1.msra.mxu0 %v497
  %535 = vmatprep.subr.mxu0 0.0
  %536 = vmatpush1.msra.mxu0 0.0
  %537 = vmatprep.subr.mxu0 0.0
  %538 = vmatpush1.msra.mxu0 0.0
  %539 = vmatprep.subr.mxu0 0.0
  %540 = vmatpush1.msra.mxu0 0.0
  %541 = vmatprep.subr.mxu0 0.0
  %542 = vmatpush1.msra.mxu0 0.0
  %543 = vmatprep.subr.mxu0 0.0
  %544 = vmatpush1.msra.mxu0 0.0
  %545 = vmatprep.subr.mxu0 0.0
  %546 = vmatpush1.msra.mxu0 0.0
  %547 = vmatprep.subr.mxu0 0.0
  %548 = vmatpush1.msra.mxu0 0.0
  %549 = vmatprep.subr.mxu0 0.0
  %550 = vmatpush1.msra.mxu0 0.0
  %551 = vmatprep.subr.mxu0 0.0
  %552 = vmatpush1.msra.mxu0 0.0
  %553 = vmatprep.subr.mxu0 0.0
  %554 = vmatpush1.msra.mxu0 0.0
  %555 = vmatprep.subr.mxu0 0.0
  %556 = vmatpush1.msra.mxu0 0.0
  %557 = vmatprep.subr.mxu0 0.0
  %558 = vmatpush1.msra.mxu0 0.0
  %559 = vmatprep.subr.mxu0 0.0
  %560 = vmatpush1.msra.mxu0 0.0
  %561 = vmatprep.subr.mxu0 0.0
  %562 = vmatpush1.msra.mxu0 0.0
  %563 = vmatprep.subr.mxu0 0.0
  %564 = vmatpush1.msra.mxu0 0.0
  %565 = vmatprep.subr.mxu0 0.0
  %566 = vmatpush1.msra.mxu0 0.0
  %567 = vmatprep.subr.mxu0 0.0
  %568 = vmatpush1.msra.mxu0 0.0
  %569 = vmatprep.subr.mxu0 0.0
  %570 = vmatpush1.msra.mxu0 0.0
  %571 = vmatprep.subr.mxu0 0.0
  %572 = vmatpush1.msra.mxu0 0.0
  %573 = vmatprep.subr.mxu0 0.0
  %574 = vmatpush1.msra.mxu0 0.0
  %575 = vmatprep.subr.mxu0 0.0
  %576 = vmatpush1.msra.mxu0 0.0
  %577 = vmatprep.subr.mxu0 0.0
  %578 = vmatpush1.msra.mxu0 0.0
  %579 = vmatprep.subr.mxu0 0.0
  %580 = vmatpush1.msra.mxu0 0.0
  %581 = vmatprep.subr.mxu0 0.0
  %582 = vmatpush1.msra.mxu0 0.0
  %583 = vmatprep.subr.mxu0 0.0
  %584 = vmatpush1.msra.mxu0 0.0
  %585 = vmatprep.subr.mxu0 0.0
  %586 = vmatpush1.msra.mxu0 0.0
  %587 = vmatprep.mubr.f32.mxu0 0.0
  %588 = vmatmul.mubr.f32.gmra.mrb[0].mxu0 %v506
  %v589 = vpop.f32.mrb[0].mxu0
  %v590 = vadd.f32 %v503, %v589
  %v591 = vpop.f32.mrb[0].mxu0
  %592 = vmatprep.mubr.f32.mxu0 0.0
  %593 = vmatmul.mubr.f32.gmra.mrb[0].mxu0 %v509
  %v594 = vpop.f32.mrb[0].mxu0
  %v595 = vadd.f32 %v503, %v594
  %v596 = vpop.f32.mrb[0].mxu0
  %597 = vmatprep.mubr.f32.mxu0 0.0
  %598 = vmatmul.mubr.f32.gmra.mrb[0].mxu0 %v512
  %v599 = vpop.f32.mrb[0].mxu0
  %v600 = vadd.f32 %v503, %v599
  %v601 = vpop.f32.mrb[0].mxu0
  %602 = vmatprep.mubr.f32.mxu0 0.0
  %603 = vmatmul.mubr.f32.gmra.mrb[0].mxu0 %v515
  %v604 = vpop.f32.mrb[0].mxu0
  %v605 = vadd.f32 %v503, %v604
  %v606 = vpop.f32.mrb[0].mxu0
  %607 = vmatprep.mubr.f32.mxu0 0.0
  %608 = vmatmul.mubr.f32.gmra.mrb[0].mxu0 %v518
  %v609 = vpop.f32.mrb[0].mxu0
  %v610 = vadd.f32 %v503, %v609
  %v611 = vpop.f32.mrb[0].mxu0
  %612 = vmatprep.mubr.f32.mxu0 0.0
  %613 = vmatmul.mubr.f32.gmra.mrb[0].mxu0 %v521
  %v614 = vpop.f32.mrb[0].mxu0
  %v615 = vadd.f32 %v503, %v614
  %v616 = vpop.f32.mrb[0].mxu0
  %617 = vdwg.mxu0
  %v618 = vmul.f32 %v590, %v282
  %v619 = vmul.f32 %v595, %v287
  %v620 = vmul.f32 %v600, %v292
  %v621 = vmul.f32 %v605, %v297
  %v622 = vmul.f32 %v610, %v302
  %v623 = vmul.f32 %v615, %v307
  %v624 = vsel %vm35, %v618, 0.0
  %v625 = vsel %vm35, %v619, 0.0
  %v626 = vadd.f32 %v624, %v625
  %v627 = vsel %vm35, %v620, 0.0
  %v628 = vadd.f32 %v626, %v627
  %v629 = vsel %vm35, %v621, 0.0
  %v630 = vadd.f32 %v628, %v629
  %v631 = vsel %vm35, %v622, 0.0
  %v632 = vadd.f32 %v630, %v631
  %v633 = vsel %vm35, %v623, 0.0
  %v634 = vadd.f32 %v632, %v633
  %v635 = vrot.slane %v634, 4
  %v636 = vadd.f32 %v634, %v635
  %v637 = vrot.slane %v636, 2
  %v638 = vadd.f32 %v636, %v637
  %v639 = vrot.slane %v638, 1
  %v640 = vadd.f32 %v638, %v639
  %v641 = vmul.f32 %v640, 0.03125
  %v642 = vsub.f32 %v618, %v641
  %v643 = vsub.f32 %v619, %v641
  %v644 = vsub.f32 %v620, %v641
  %v645 = vsub.f32 %v621, %v641
  %v646 = vsub.f32 %v622, %v641
  %v647 = vsub.f32 %v623, %v641
  %v648 = vmul.f32 %v642, %v282
  %v649 = vmul.f32 %v643, %v287
  %v650 = vmul.f32 %v644, %v292
  %v651 = vmul.f32 %v645, %v297
  %v652 = vmul.f32 %v646, %v302
  %v653 = vmul.f32 %v647, %v307
  %v654 = vmul.f32 %v648, %v648
  %v655 = vmul.f32 %v649, %v649
  %v656 = vmul.f32 %v650, %v650
  %v657 = vmul.f32 %v651, %v651
  %v658 = vmul.f32 %v652, %v652
  %v659 = vmul.f32 %v653, %v653
  %v660 = vsel %vm35, %v654, 0.0
  %v661 = vsel %vm35, %v655, 0.0
  %v662 = vadd.f32 %v660, %v661
  %v663 = vsel %vm35, %v656, 0.0
  %v664 = vadd.f32 %v662, %v663
  %v665 = vsel %vm35, %v657, 0.0
  %v666 = vadd.f32 %v664, %v665
  %v667 = vsel %vm35, %v658, 0.0
  %v668 = vadd.f32 %v666, %v667
  %v669 = vsel %vm35, %v659, 0.0
  %v670 = vadd.f32 %v668, %v669
  %v671 = vrot.slane %v670, 4
  %v672 = vadd.f32 %v670, %v671
  %v673 = vrot.slane %v672, 2
  %v674 = vadd.f32 %v672, %v673
  %v675 = vrot.slane %v674, 1
  %v676 = vadd.f32 %v674, %v675
  %v677 = vmul.f32 %v676, 0.03125
  %v678 = vadd.f32 %v677, 1e-05
  %v679 = vrsqrt.pop %v678
  %v680 = vld [vmem:[%s8] sm:$0x1]
  %v681 = vmul.f32 %v679, %v680
  %v682 = vlaneseq
  %v683 = vshrl.u32 %v682, 7
  %v684 = vsub.s32 0, %v683
  %v685 = vrot.slane %v681, %v684
  %v686 = vmul.f32 %v648, %v685
  %v687 = vmul.f32 %v649, %v685
  %v688 = vmul.f32 %v650, %v685
  %v689 = vmul.f32 %v651, %v685
  %v690 = vmul.f32 %v652, %v685
  %v691 = vmul.f32 %v653, %v685
  %v692 = vld [vmem:[%s9] sm:$0x1]
  %v694 = vlaneseq
  %v695 = vshrl.u32 %v694, 7
  %v696 = vsub.s32 0, %v695
  %v697 = vrot.slane %v692, %v696
  %v699 = vadd.f32 %v686, %v697
  %v700 = vadd.f32 %v687, %v697
  %v701 = vadd.f32 %v688, %v697
  %v702 = vadd.f32 %v689, %v697
  %v703 = vadd.f32 %v690, %v697
  %v704 = vadd.f32 %v691, %v697
  %v705 = vadd.f32 %v699, %v51
  %v706 = vadd.f32 %v700, %v52
  %v707 = vadd.f32 %v701, %v53
  %v708 = vadd.f32 %v702, %v54
  %v709 = vadd.f32 %v703, %v55
  %v710 = vadd.f32 %v704, %v56
  %v711 = vmax.f32 %v705, 0.0
  %v712 = vmax.f32 %v706, 0.0
  %v713 = vmax.f32 %v707, 0.0
  %v714 = vmax.f32 %v708, 0.0
  %v715 = vmax.f32 %v709, 0.0
  %v716 = vmax.f32 %v710, 0.0
  %717 = vst.msk [vmem:[%s10] sm:$0xff] %vm35, %v711
  %718 = vst.msk [vmem:[%s10 + $0x8] sm:$0xff] %vm35, %v712
  %719 = vst.msk [vmem:[%s10 + $0x10] sm:$0xff] %vm35, %v713
  %720 = vst.msk [vmem:[%s10 + $0x18] sm:$0xff] %vm35, %v714
  %721 = vst.msk [vmem:[%s10 + $0x20] sm:$0xff] %vm35, %v715
  %722 = vst.msk [vmem:[%s10 + $0x28] sm:$0xff] %vm35, %v716
  // Predicated region
  $region42: #{tpu_custom_call.1} parent=0 // pred_check
    _
  $region43: #{tpu_custom_call.1} parent=0 // pred_check_branch
    %724 = sbr.rel (0) target = $region45
  $region44: #{tpu_custom_call.1} parent=0 // pred_region
    _
  $region45: #{tpu_custom_call.1} parent=0 // pred_fallthru
    _
  // Predicated region
  $region46: #{tpu_custom_call.1} parent=0 // pred_check
    _
  $region47: #{tpu_custom_call.1} parent=0 // pred_check_branch
    %726 = sbr.rel (0) target = $region49
  $region48: #{tpu_custom_call.1} parent=0 // pred_region
    _
  $region49: #{tpu_custom_call.1} parent=0 // pred_fallthru
    _

</llo_original>
